<compile_context>
chip_gen: v7x
topology: tpu7x:2x2x1
jax: 0.10.0
libtpu: 0.0.40
codegen_flags: <defaults>
</compile_context>

<pallas_src>
from functools import partial

import numpy as np
import jax
import jax.numpy as jnp
from jax.experimental import pallas as pl
from jax.experimental.pallas import tpu as pltpu

BN_EPS = 1e-5
NEG_SLOPE = 0.2  # activate_func() == LeakyReLU(0.2)


def _mlp_kernel(x_ref, *refs, layer_info):
    """Fused MLP on one (C_in, tile_hw) tile of one batch element.

    Kernel view (batch axis squeezed by the BlockSpec):
      x_ref:     (Cin0, tile_hw)
      w_l refs:  (Cout_l, Cin_l)     BN-folded 1x1-conv weights
      bias_ref:  (sum_cout_pad8, 1)  BN-folded biases, 8-sublane-aligned offsets
      out_ref:   (Cout_last, tile_hw)
    layer_info = ((cout, bias_offset, apply_act), ...)  -- static.
    """
    out_ref = refs[-1]
    bias_ref = refs[-2]
    w_refs = refs[:-2]

    h = x_ref[...].astype(jnp.float32)                      # (Cin0, tile_hw)
    for (cout, off, apply_act), w_ref in zip(layer_info, w_refs):
        w = w_ref[...].astype(jnp.float32)                  # (Cout, Cin)
        b = bias_ref[off:off + cout, :]                     # (Cout, 1) -> lane broadcast
        # 1x1 conv (+ folded BN): lane-dense output (Cout, tile_hw)
        h = jnp.dot(w, h, preferred_element_type=jnp.float32) + b
        if apply_act:
            h = jnp.maximum(h, NEG_SLOPE * h)               # LeakyReLU(0.2)
    out_ref[...] = h.astype(out_ref.dtype)


def mlp_forward(x_nchw, layer_params, final_proc=True, tile_hw=1024, out_dtype=None):
    """layer_params: list of dicts with keys w (Cout,Cin), b, gamma, beta, mean, var."""
    n, c, hgt, wdt = x_nchw.shape
    hw = hgt * wdt
    if out_dtype is None:
        out_dtype = x_nchw.dtype

    # NCHW-native: merge trailing spatial dims (no copy, no transpose).
    x3d = x_nchw.reshape(n, c, hw)

    # Lane-tile selection: cap at 1024 (vreg pressure of the (32, tile) intermediate),
    # full extent if it fits, otherwise a multiple of 128 with a masked ragged tail.
    tile_hw = min(int(tile_hw), 1024)
    if hw <= tile_hw:
        tile = hw
    else:
        tile = max(128, (tile_hw // 128) * 128)
    n_tiles = pl.cdiv(hw, tile)
    # Keep >= 2 total blocks so the "parallel" axes can feed both v7x TensorCores.
    if n * n_tiles < 2 and hw >= 256:
        tile = max(128, ((hw // 2 + 127) // 128) * 128)
        n_tiles = pl.cdiv(hw, tile)

    nl = len(layer_params)
    w_args = []
    biases = []
    layer_info = []
    in_specs = [pl.BlockSpec((pl.Squeezed(), c, tile), lambda b, i: (b, 0, i))]
    off = 0
    for li, p in enumerate(layer_params):
        cout, cin = p["w"].shape
        apply_act = (li < nl - 1) or final_proc
        w = jnp.asarray(p["w"], jnp.float32)                # (Cout, Cin)
        b = jnp.asarray(p["b"], jnp.float32)                # (Cout,)
        if apply_act:
            # fold eval-mode BatchNorm into the conv: y = scale*(Wx+b)+shift
            scale = (p["gamma"] / jnp.sqrt(p["var"] + BN_EPS)).astype(jnp.float32)
            shift = (p["beta"] - p["mean"] * scale).astype(jnp.float32)
            w = w * scale[:, None]
            b = b * scale + shift
        w_args.append(w)
        in_specs.append(pl.BlockSpec((cout, cin), lambda b, i: (0, 0)))
        layer_info.append((cout, off, apply_act))
        cout_pad = -(-cout // 8) * 8                        # 8-sublane aligned offsets
        biases.append(jnp.zeros((cout_pad,), jnp.float32).at[:cout].set(b))
        off += cout_pad

    bias_packed = jnp.concatenate(biases).reshape(off, 1)   # (sum_cout_pad8, 1)
    in_specs.append(pl.BlockSpec((off, 1), lambda b, i: (0, 0)))

    c_out = layer_params[-1]["w"].shape[0]
    out3d = pl.pallas_call(
        partial(_mlp_kernel, layer_info=tuple(layer_info)),
        out_shape=jax.ShapeDtypeStruct((n, c_out, hw), out_dtype),
        grid=(n, n_tiles),
        in_specs=in_specs,
        out_specs=pl.BlockSpec((pl.Squeezed(), c_out, tile), lambda b, i: (b, 0, i)),
        compiler_params=pltpu.CompilerParams(
            dimension_semantics=("parallel", "parallel")),
    )(x3d, *w_args, bias_packed)

    return out3d.reshape(n, c_out, hgt, wdt)                # free reshape back to NCHW


def mlp_reference(x_nchw, layer_params, final_proc=True):
    """Plain-JAX reference mirroring the PyTorch eval-mode forward (NCHW)."""
    h = x_nchw.astype(jnp.float32)
    nl = len(layer_params)
    for li, p in enumerate(layer_params):
        h = jnp.einsum("nchw,oc->nohw", h, p["w"]) + p["b"][None, :, None, None]
        if li < nl - 1 or final_proc:
            scale = p["gamma"] / jnp.sqrt(p["var"] + BN_EPS)
            shift = p["beta"] - p["mean"] * scale
            h = h * scale[None, :, None, None] + shift[None, :, None, None]
            h = jnp.where(h > 0, h, NEG_SLOPE * h)
    return h


def make_params(key, channels):
    """Deterministic synthetic parameters (Conv2d 1x1 weight/bias + BN stats/affine)."""
    params = []
    for cin, cout in zip(channels[:-1], channels[1:]):
        key, kw, kb, kg, kbeta, km, kv = jax.random.split(key, 7)
        params.append(dict(
            w=jax.random.normal(kw, (cout, cin), jnp.float32) * 0.2,
            b=jax.random.normal(kb, (cout,), jnp.float32) * 0.1,
            gamma=1.0 + 0.1 * jax.random.normal(kg, (cout,), jnp.float32),
            beta=0.1 * jax.random.normal(kbeta, (cout,), jnp.float32),
            mean=0.1 * jax.random.normal(km, (cout,), jnp.float32),
            var=jax.random.uniform(kv, (cout,), jnp.float32, 0.5, 1.5),
        ))
    return params


if __name__ == "__main__":
    key = jax.random.PRNGKey(0)
    kx, kp = jax.random.split(key)

    channels = (4, 32, 32, 8)          # [in, hid1, hid2, out]
    x = jax.random.normal(kx, (2, 4, 16, 16), jnp.float32)   # NCHW, dimension=2
    params = make_params(kp, channels)

    # final_proc=True path
    out = mlp_forward(x, params, final_proc=True)
    out = jax.block_until_ready(out)
    ref = mlp_reference(x, params, final_proc=True)
    np.testing.assert_allclose(np.asarray(out), np.asarray(ref), rtol=1e-4, atol=1e-4)

    # final_proc=False path (last layer: plain conv, no BN/activation)
    out_nf = mlp_forward(x, params, final_proc=False)
    out_nf = jax.block_until_ready(out_nf)
    ref_nf = mlp_reference(x, params, final_proc=False)
    np.testing.assert_allclose(np.asarray(out_nf), np.asarray(ref_nf), rtol=1e-4, atol=1e-4)

    print("KERNEL_OK")
</pallas_src>

<mosaic_0001>
module attributes {stable_mosaic.version = 11 : i64} {
  func.func @_mlp_kernel(%arg0: i32, %arg1: i32, %arg2: memref<1x4x256xf32, #tpu.memory_space<vmem>>, %arg3: memref<32x4xf32, #tpu.memory_space<vmem>>, %arg4: memref<32x32xf32, #tpu.memory_space<vmem>>, %arg5: memref<8x32xf32, #tpu.memory_space<vmem>>, %arg6: memref<72x1xf32, #tpu.memory_space<vmem>>, %arg7: memref<1x8x256xf32, #tpu.memory_space<vmem>>) attributes {dimension_semantics = [#tpu.dimension_semantics<parallel>, #tpu.dimension_semantics<parallel>], iteration_bounds = array<i64: 2, 1>, scalar_prefetch = 0 : i64, scratch_operands = 0 : i64, tpu.core_type = #tpu.core_type<tc>, window_params = [{transform_indices = @transform_0, window_bounds = array<i64: 1, 4, 256>}, {pipeline_mode = #tpu.pipeline_mode<synchronous>, transform_indices = @transform_1, window_bounds = array<i64: 32, 4>}, {pipeline_mode = #tpu.pipeline_mode<synchronous>, transform_indices = @transform_2, window_bounds = array<i64: 32, 32>}, {pipeline_mode = #tpu.pipeline_mode<synchronous>, transform_indices = @transform_3, window_bounds = array<i64: 8, 32>}, {pipeline_mode = #tpu.pipeline_mode<synchronous>, transform_indices = @transform_4, window_bounds = array<i64: 72, 1>}, {transform_indices = @transform_5, window_bounds = array<i64: 1, 8, 256>}]} {
    %c0 = arith.constant 0 : index
    %c0_0 = arith.constant 0 : index
    %c0_1 = arith.constant 0 : index
    %0 = vector.load %arg2[%c0, %c0_0, %c0_1] : memref<1x4x256xf32, #tpu.memory_space<vmem>>, vector<1x4x256xf32>
    %1 = vector.shape_cast %0 : vector<1x4x256xf32> to vector<4x256xf32>
    %c0_2 = arith.constant 0 : index
    %c0_3 = arith.constant 0 : index
    %2 = vector.load %arg3[%c0_2, %c0_3] : memref<32x4xf32, #tpu.memory_space<vmem>>, vector<32x4xf32>
    %c0_4 = arith.constant 0 : index
    %c0_5 = arith.constant 0 : index
    %3 = vector.load %arg6[%c0_4, %c0_5] : memref<72x1xf32, #tpu.memory_space<vmem>>, vector<32x1xf32>
    %cst = arith.constant dense<0.000000e+00> : vector<32x256xf32>
    %4 = tpu.matmul %2, %1, %cst {dimension_numbers = #tpu.dot_dimension_numbers<[1], [0], [0], [1], [0, 0, 1, 1], [], []>} : vector<32x4xf32>, vector<4x256xf32>, vector<32x256xf32> -> vector<32x256xf32>
    %5 = vector.broadcast %3 : vector<32x1xf32> to vector<32x256xf32>
    %6 = arith.addf %4, %5 : vector<32x256xf32>
    %cst_6 = arith.constant 2.000000e-01 : f32
    %7 = vector.broadcast %cst_6 : f32 to vector<32x256xf32>
    %8 = arith.mulf %7, %6 : vector<32x256xf32>
    %9 = arith.maximumf %6, %8 : vector<32x256xf32>
    %c0_7 = arith.constant 0 : index
    %c0_8 = arith.constant 0 : index
    %10 = vector.load %arg4[%c0_7, %c0_8] : memref<32x32xf32, #tpu.memory_space<vmem>>, vector<32x32xf32>
    %c32 = arith.constant 32 : index
    %c0_9 = arith.constant 0 : index
    %11 = vector.load %arg6[%c32, %c0_9] : memref<72x1xf32, #tpu.memory_space<vmem>>, vector<32x1xf32>
    %cst_10 = arith.constant dense<0.000000e+00> : vector<32x256xf32>
    %12 = tpu.matmul %10, %9, %cst_10 {dimension_numbers = #tpu.dot_dimension_numbers<[1], [0], [0], [1], [0, 0, 1, 1], [], []>} : vector<32x32xf32>, vector<32x256xf32>, vector<32x256xf32> -> vector<32x256xf32>
    %13 = vector.broadcast %11 : vector<32x1xf32> to vector<32x256xf32>
    %14 = arith.addf %12, %13 : vector<32x256xf32>
    %cst_11 = arith.constant 2.000000e-01 : f32
    %15 = vector.broadcast %cst_11 : f32 to vector<32x256xf32>
    %16 = arith.mulf %15, %14 : vector<32x256xf32>
    %17 = arith.maximumf %14, %16 : vector<32x256xf32>
    %c0_12 = arith.constant 0 : index
    %c0_13 = arith.constant 0 : index
    %18 = vector.load %arg5[%c0_12, %c0_13] : memref<8x32xf32, #tpu.memory_space<vmem>>, vector<8x32xf32>
    %c64 = arith.constant 64 : index
    %c0_14 = arith.constant 0 : index
    %19 = vector.load %arg6[%c64, %c0_14] : memref<72x1xf32, #tpu.memory_space<vmem>>, vector<8x1xf32>
    %cst_15 = arith.constant dense<0.000000e+00> : vector<8x256xf32>
    %20 = tpu.matmul %18, %17, %cst_15 {dimension_numbers = #tpu.dot_dimension_numbers<[1], [0], [0], [1], [0, 0, 1, 1], [], []>} : vector<8x32xf32>, vector<32x256xf32>, vector<8x256xf32> -> vector<8x256xf32>
    %21 = vector.broadcast %19 : vector<8x1xf32> to vector<8x256xf32>
    %22 = arith.addf %20, %21 : vector<8x256xf32>
    %cst_16 = arith.constant 2.000000e-01 : f32
    %23 = vector.broadcast %cst_16 : f32 to vector<8x256xf32>
    %24 = arith.mulf %23, %22 : vector<8x256xf32>
    %25 = arith.maximumf %22, %24 : vector<8x256xf32>
    %c0_17 = arith.constant 0 : index
    %c0_18 = arith.constant 0 : index
    %c0_19 = arith.constant 0 : index
    %26 = vector.load %arg7[%c0_17, %c0_18, %c0_19] : memref<1x8x256xf32, #tpu.memory_space<vmem>>, vector<1x8x256xf32>
    %27 = vector.shape_cast %26 : vector<1x8x256xf32> to vector<8x256xf32>
    %28 = vector.shape_cast %25 : vector<8x256xf32> to vector<1x8x256xf32>
    tpu.vector_store %arg7[%c0_17, %c0_18, %c0_19], %28 {strides = array<i32>} : memref<1x8x256xf32, #tpu.memory_space<vmem>>, vector<1x8x256xf32>,
    return
  }
  func.func @transform_0(%arg0: i32, %arg1: i32) -> (i32, i32, i32) {
    %c0_i32 = arith.constant 0 : i32
    %c0_i32_0 = arith.constant 0 : i32
    return %arg0, %c0_i32, %arg1 : i32, i32, i32
  }
  func.func @transform_1(%arg0: i32, %arg1: i32) -> (i32, i32) {
    %c0_i32 = arith.constant 0 : i32
    %c0_i32_0 = arith.constant 0 : i32
    %c0_i32_1 = arith.constant 0 : i32
    return %c0_i32, %c0_i32_0 : i32, i32
  }
  func.func @transform_2(%arg0: i32, %arg1: i32) -> (i32, i32) {
    %c0_i32 = arith.constant 0 : i32
    %c0_i32_0 = arith.constant 0 : i32
    %c0_i32_1 = arith.constant 0 : i32
    return %c0_i32, %c0_i32_0 : i32, i32
  }
  func.func @transform_3(%arg0: i32, %arg1: i32) -> (i32, i32) {
    %c0_i32 = arith.constant 0 : i32
    %c0_i32_0 = arith.constant 0 : i32
    %c0_i32_1 = arith.constant 0 : i32
    return %c0_i32, %c0_i32_0 : i32, i32
  }
  func.func @transform_4(%arg0: i32, %arg1: i32) -> (i32, i32) {
    %c0_i32 = arith.constant 0 : i32
    %c0_i32_0 = arith.constant 0 : i32
    %c0_i32_1 = arith.constant 0 : i32
    return %c0_i32, %c0_i32_0 : i32, i32
  }
  func.func @transform_5(%arg0: i32, %arg1: i32) -> (i32, i32, i32) {
    %c0_i32 = arith.constant 0 : i32
    %c0_i32_0 = arith.constant 0 : i32
    return %arg0, %c0_i32, %arg1 : i32, i32, i32
  }
}

</mosaic_0001>

<llo_original>
// kernel: tpu_custom_call.1
$region0: #{tpu_custom_call.1}
  #allocation0 [shape = 'u32[]', space=smem, size = 0x4, offset = 0x4, fixed_abs, tag = 'smem constant byte address 0x4 - core index']
  #allocation1 [shape = 'u32[144,128]{1,0:T(1,128)}', space=vmem, size = 0x12000, scoped, tag = 'internal scratch']
  %s0 = inlined_call_operand.vmem [shape: f32[2,4,256], index: 0, kind: input, shape index: {}]
  %s1 = inlined_call_operand.vmem [shape: f32[32,4], index: 1, kind: input, shape index: {}]
  %s2 = inlined_call_operand.vmem [shape: f32[32,32], index: 2, kind: input, shape index: {}]
  %s3 = inlined_call_operand.vmem [shape: f32[8,32], index: 3, kind: input, shape index: {}]
  %s4 = inlined_call_operand.vmem [shape: f32[72,1], index: 4, kind: input, shape index: {}]
  %s5 = inlined_call_operand.hbm [shape: f32[2,8,256], index: 5, kind: output, shape index: {}]
  %s6 = sld [smem:[#allocation0]]
  $region53: #{tpu_custom_call.1} parent=0
    _
  %s8 = ssub.s32 1, %s6
  %s9 = scalar_select 0, %s8, %s6
  $region1: #{tpu_custom_call.1} parent=0
    #allocation2 [shape = 'u8[16384]{0}', space=vmem, size = 0x4000, scoped, tag = 'output window, operand 0']
    #allocation3 [shape = 's32[2]{0}', space=sflag, size = 0x8, scoped, tag = 'scoped memory for tpu_custom_call.1']
    %10 = vsyncpa [#allocation3], 0
    %s11 = scalar_lea.sflag [#allocation3], 1
    %12 = vsyncpa %s11, 0
    loop: start=0, step=1, limit=4
    $region2: #{tpu_custom_call.1} parent=1 // loop_pre_header
      _
    $region3: #{tpu_custom_call.1} parent=1 // loop_header
      %s14 = sphi 0, %s18
      %p15 = scmp.ge.s32.totalorder %s14, 4
      %s21 = sphi 0, %s33
      %s22 = sphi 0, %s29
      %s23 = sphi 0, %s21
      %s24 = sphi 0, %s22
      %s25 = sphi 0, %s23
      %s26 = sphi 0, %s24
      %s38 = sphi 0, %s40
      %s41 = sphi 0, %s38
      %s42 = sphi 0, %s41
      %s58 = sphi 0, %s42
      %s62 = sphi 0, %s62
      %s64 = sphi 0, %s62
      %s65 = sphi 0, %s64
      %s79 = sphi 0, %s65
      %s83 = sphi 0, %s83
      %s85 = sphi 0, %s83
      %s86 = sphi 0, %s85
      %s100 = sphi 0, %s86
      %s104 = sphi 0, %s104
      %s106 = sphi 0, %s104
      %s107 = sphi 0, %s106
      %s121 = sphi 0, %s107
      %s125 = sphi 0, %s125
      %s127 = sphi 0, %s125
      %s128 = sphi 0, %s127
      %s142 = sphi 0, %s128
      %s150 = sphi 0, %s152
      %s153 = sphi 0, %s150
      %s154 = sphi 0, %s153
      %s170 = sphi 0, %s154
    $region4: #{tpu_custom_call.1} parent=1 // loop_header_branch
      %17 = sbr.rel (%p15) target = $region8
    $region5: #{tpu_custom_call.1} parent=1 // loop_body
      %s19 = ssub.s32 %s14, 1
      %s20 = ssub.s32 %s14, 2
      %s27 = sadd.s32 1, %s22
      %p28 = scmp.ge.s32.totalorder %s27, 1
      %s29 = scalar_select %p28, 0, %s27
      %s30 = sadd.s32 1, %s21
      %s31 = scalar_select %p28, %s30, %s21
      %p32 = scmp.ge.s32.totalorder %s31, 2
      %s33 = scalar_select %p32, 0, %s31
      %s34 = ssub.s32 %s21, %s33
      %s35 = ssub.s32 %s22, %s29
      %s36 = sor.u32 %s34, %s35
      %p37 = scmp.eq.s32.totalorder %s36, 0
      %s39 = sadd.s32 %s38, 1
      %s40 = scalar_select %p37, %s38, %s39
      %p43 = pneg %p37
      %p44 = scmp.eq.s32.totalorder %s14, 1
      %p45 = por %p43, %p44
      %p46 = scmp.ne.s32.totalorder %s38, %s41
      %p47 = scmp.eq.s32.totalorder %s14, 0
      %p48 = por %p46, %p47
      %p49 = scmp.ne.s32.totalorder %s38, %s41
      %p50 = scmp.eq.s32.totalorder %s19, 1
      %p51 = por %p49, %p50
      %p52 = scmp.ne.s32.totalorder %s41, %s42
      %p53 = scmp.eq.s32.totalorder %s19, 0
      %p54 = por %p52, %p53
      %p55 = scmp.ne.s32.totalorder %s41, %s42
      %p56 = scmp.eq.s32.totalorder %s20, 1
      %p57 = por %p55, %p56
      %p59 = scmp.ne.s32.totalorder %s42, %s58
      %p60 = scmp.eq.s32.totalorder %s20, 0
      %p61 = por %p59, %p60
      %s63 = sadd.s32 %s62, 1
      %p66 = scmp.eq.s32.totalorder %s14, 1
      %p67 = scmp.ne.s32.totalorder %s62, %s64
      %p68 = scmp.eq.s32.totalorder %s14, 0
      %p69 = por %p67, %p68
      %p70 = scmp.ne.s32.totalorder %s62, %s64
      %p71 = scmp.eq.s32.totalorder %s19, 1
      %p72 = por %p70, %p71
      %p73 = scmp.ne.s32.totalorder %s64, %s65
      %p74 = scmp.eq.s32.totalorder %s19, 0
      %p75 = por %p73, %p74
      %p76 = scmp.ne.s32.totalorder %s64, %s65
      %p77 = scmp.eq.s32.totalorder %s20, 1
      %p78 = por %p76, %p77
      %p80 = scmp.ne.s32.totalorder %s65, %s79
      %p81 = scmp.eq.s32.totalorder %s20, 0
      %p82 = por %p80, %p81
      %s84 = sadd.s32 %s83, 1
      %p87 = scmp.eq.s32.totalorder %s14, 1
      %p88 = scmp.ne.s32.totalorder %s83, %s85
      %p89 = scmp.eq.s32.totalorder %s14, 0
      %p90 = por %p88, %p89
      %p91 = scmp.ne.s32.totalorder %s83, %s85
      %p92 = scmp.eq.s32.totalorder %s19, 1
      %p93 = por %p91, %p92
      %p94 = scmp.ne.s32.totalorder %s85, %s86
      %p95 = scmp.eq.s32.totalorder %s19, 0
      %p96 = por %p94, %p95
      %p97 = scmp.ne.s32.totalorder %s85, %s86
      %p98 = scmp.eq.s32.totalorder %s20, 1
      %p99 = por %p97, %p98
      %p101 = scmp.ne.s32.totalorder %s86, %s100
      %p102 = scmp.eq.s32.totalorder %s20, 0
      %p103 = por %p101, %p102
      %s105 = sadd.s32 %s104, 1
      %p108 = scmp.eq.s32.totalorder %s14, 1
      %p109 = scmp.ne.s32.totalorder %s104, %s106
      %p110 = scmp.eq.s32.totalorder %s14, 0
      %p111 = por %p109, %p110
      %p112 = scmp.ne.s32.totalorder %s104, %s106
      %p113 = scmp.eq.s32.totalorder %s19, 1
      %p114 = por %p112, %p113
      %p115 = scmp.ne.s32.totalorder %s106, %s107
      %p116 = scmp.eq.s32.totalorder %s19, 0
      %p117 = por %p115, %p116
      %p118 = scmp.ne.s32.totalorder %s106, %s107
      %p119 = scmp.eq.s32.totalorder %s20, 1
      %p120 = por %p118, %p119
      %p122 = scmp.ne.s32.totalorder %s107, %s121
      %p123 = scmp.eq.s32.totalorder %s20, 0
      %p124 = por %p122, %p123
      %s126 = sadd.s32 %s125, 1
      %p129 = scmp.eq.s32.totalorder %s14, 1
      %p130 = scmp.ne.s32.totalorder %s125, %s127
      %p131 = scmp.eq.s32.totalorder %s14, 0
      %p132 = por %p130, %p131
      %p133 = scmp.ne.s32.totalorder %s125, %s127
      %p134 = scmp.eq.s32.totalorder %s19, 1
      %p135 = por %p133, %p134
      %p136 = scmp.ne.s32.totalorder %s127, %s128
      %p137 = scmp.eq.s32.totalorder %s19, 0
      %p138 = por %p136, %p137
      %p139 = scmp.ne.s32.totalorder %s127, %s128
      %p140 = scmp.eq.s32.totalorder %s20, 1
      %p141 = por %p139, %p140
      %p143 = scmp.ne.s32.totalorder %s128, %s142
      %p144 = scmp.eq.s32.totalorder %s20, 0
      %p145 = por %p143, %p144
      %s146 = ssub.s32 %s21, %s33
      %s147 = ssub.s32 %s22, %s29
      %s148 = sor.u32 %s146, %s147
      %p149 = scmp.eq.s32.totalorder %s148, 0
      %s151 = sadd.s32 %s150, 1
      %s152 = scalar_select %p149, %s150, %s151
      %p155 = pneg %p149
      %p156 = scmp.eq.s32.totalorder %s14, 1
      %p157 = por %p155, %p156
      %p158 = scmp.ne.s32.totalorder %s150, %s153
      %p159 = scmp.eq.s32.totalorder %s14, 0
      %p160 = por %p158, %p159
      %p161 = scmp.ne.s32.totalorder %s150, %s153
      %p162 = scmp.eq.s32.totalorder %s19, 1
      %p163 = por %p161, %p162
      %p164 = scmp.ne.s32.totalorder %s153, %s154
      %p165 = scmp.eq.s32.totalorder %s19, 0
      %p166 = por %p164, %p165
      %p167 = scmp.ne.s32.totalorder %s153, %s154
      %p168 = scmp.eq.s32.totalorder %s20, 1
      %p169 = por %p167, %p168
      %p171 = scmp.ne.s32.totalorder %s154, %s170
      %p172 = scmp.eq.s32.totalorder %s20, 0
      %p173 = por %p171, %p172
      %p174 = scmp.le.s32.totalorder 1, %s14
      %p175 = scmp.lt.s32.totalorder %s14, 3
      %p176 = pnand %p174, %p175
      %p177 = pneg %p176
      // Predicated region
      $region9: #{tpu_custom_call.1} parent=5 // pred_check
        _
      $region10: #{tpu_custom_call.1} parent=5 // pred_check_branch
        %179 = sbr.rel (%p176) target = $region12
      $region11: #{tpu_custom_call.1} parent=5 // pred_region
        %s180 = ssub.s32 %s14, 1
        // Predicated region
        $region13: #{tpu_custom_call.1} parent=11 // pred_check
          %p181 = pneg %p75
        $region14: #{tpu_custom_call.1} parent=11 // pred_check_branch
          %183 = sbr.rel (%p181) target = $region16
        $region15: #{tpu_custom_call.1} parent=11 // pred_region
          _
        $region16: #{tpu_custom_call.1} parent=11 // pred_fallthru
          _
        // Predicated region
        $region17: #{tpu_custom_call.1} parent=11 // pred_check
          %p184 = pneg %p96
        $region18: #{tpu_custom_call.1} parent=11 // pred_check_branch
          %186 = sbr.rel (%p184) target = $region20
        $region19: #{tpu_custom_call.1} parent=11 // pred_region
          _
        $region20: #{tpu_custom_call.1} parent=11 // pred_fallthru
          _
        // Predicated region
        $region21: #{tpu_custom_call.1} parent=11 // pred_check
          %p187 = pneg %p117
        $region22: #{tpu_custom_call.1} parent=11 // pred_check_branch
          %189 = sbr.rel (%p187) target = $region24
        $region23: #{tpu_custom_call.1} parent=11 // pred_region
          _
        $region24: #{tpu_custom_call.1} parent=11 // pred_fallthru
          _
        // Predicated region
        $region25: #{tpu_custom_call.1} parent=11 // pred_check
          %p190 = pneg %p138
        $region26: #{tpu_custom_call.1} parent=11 // pred_check_branch
          %192 = sbr.rel (%p190) target = $region28
        $region27: #{tpu_custom_call.1} parent=11 // pred_region
          _
        $region28: #{tpu_custom_call.1} parent=11 // pred_fallthru
          _
      $region12: #{tpu_custom_call.1} parent=5 // pred_fallthru
        _
      %p193 = scmp.lt.s32.totalorder %s14, 2
      // Predicated region
      $region29: #{tpu_custom_call.1} parent=5 // pred_check
        %p194 = pneg %p193
      $region30: #{tpu_custom_call.1} parent=5 // pred_check_branch
        %196 = sbr.rel (%p194) target = $region32
      $region31: #{tpu_custom_call.1} parent=5 // pred_region
        // Predicated region
        $region33: #{tpu_custom_call.1} parent=31 // pred_check
          %p197 = pneg %p48
        $region34: #{tpu_custom_call.1} parent=31 // pred_check_branch
          %199 = sbr.rel (%p197) target = $region36
        $region35: #{tpu_custom_call.1} parent=31 // pred_region
          %s200 = smul.u32 2, %s22
          %p201 = scmp.lt.s32.totalorder %s21, 1
          %s202 = scalar_select %p201, %s21, 1
          %p203 = scmp.lt.s32.totalorder %s200, 1
          %s204 = scalar_select %p203, %s200, 1
          %s205 = smul.addr %s202, 2
          %s206 = sadd.s32 %s204, %s205
          %s207 = smul.addr %s206, 4
          %s208 = scalar_lea.vmem %s0, %s207
          %s209 = smul.u32 2, %s22
        $region36: #{tpu_custom_call.1} parent=31 // pred_fallthru
          _
      $region32: #{tpu_custom_call.1} parent=5 // pred_fallthru
        _
      %p210 = scmp.le.s32.totalorder 1, %s14
      %p211 = scmp.lt.s32.totalorder %s14, 3
      %p212 = pnand %p210, %p211
      %p213 = pneg %p212
      // Predicated region
      $region37: #{tpu_custom_call.1} parent=5 // pred_check
        _
      $region38: #{tpu_custom_call.1} parent=5 // pred_check_branch
        %215 = sbr.rel (%p212) target = $region40
      $region39: #{tpu_custom_call.1} parent=5 // pred_region
        %s216 = ssub.s32 %s14, 1
        %s217 = smul.u32 2, %s24
        %p218 = scmp.lt.s32.totalorder %s23, 1
        %s219 = scalar_select %p218, %s23, 1
        %p220 = scmp.lt.s32.totalorder %s217, 1
        %s221 = scalar_select %p220, %s217, 1
        %s222 = smul.addr %s219, 2
        %s223 = sadd.s32 %s221, %s222
        %s224 = smul.addr %s223, 4
        %s225 = scalar_lea.vmem %s0, %s224
        %p226 = pneg %p54
        %p227 = pneg %p51
        %p228 = pneg %p75
        %p229 = pneg %p72
        %p230 = pneg %p96
        %p231 = pneg %p93
        %p232 = pneg %p117
        %p233 = pneg %p114
        %p234 = pneg %p138
        %p235 = pneg %p135
        %p236 = pneg %p166
        %p237 = pneg %p163
        %s238 = sand.u32 %s153, 1
        %s239 = scalar_lea.sflag [#allocation3], %s238
        %s240 = sand.u32 %s153, 1
        %s241 = smul.addr %s240, 16
        %s242 = scalar_lea.vmem [#allocation2], %s241
        %s243 = smul.u32 2, %s24
        %p244 = scmp.lt.s32.totalorder %s23, 1
        %s245 = scalar_select %p244, %s23, 1
        %p246 = scmp.lt.s32.totalorder %s243, 1
        %s247 = scalar_select %p246, %s243, 1
        %s248 = smul.addr %s245, 2
        %s249 = sadd.s32 %s247, %s248
        %s250 = smul.addr %s249, 4
        %s251 = scalar_lea.vmem %s0, %s250
        %s252 = smul.u32 2, %s24
        %s253 = smul.u32 2, %s24
        %v254 = vld [vmem:[%s251] sm:$0xff]
        %v255 = vld [vmem:[%s1] sm:$0xff]
        %v256 = vld [vmem:[%s1 + $0x8] sm:$0xff]
        %v257 = vld [vmem:[%s1 + $0x10] sm:$0xff]
        %v258 = vld [vmem:[%s1 + $0x18] sm:$0xff]
        %v259 = vld [vmem:[%s4] sm:$0xff]
        %v260 = vld [vmem:[%s4 + $0x8] sm:$0xff]
        %v261 = vld [vmem:[%s4 + $0x10] sm:$0xff]
        %v262 = vld [vmem:[%s4 + $0x18] sm:$0xff]
        %264 = vset.pattern.permute.xlu0 0
        %265 = vperm.xlu0 %264, %v259
        %v266 = vpop.permute.xlu0 %265
        %269 = vset.pattern.permute.xlu0 0
        %270 = vperm.xlu0 %269, %v260
        %v271 = vpop.permute.xlu0 %270
        %274 = vset.pattern.permute.xlu0 0
        %275 = vperm.xlu0 %274, %v261
        %v276 = vpop.permute.xlu0 %275
        %279 = vset.pattern.permute.xlu0 0
        %280 = vperm.xlu0 %279, %v262
        %v281 = vpop.permute.xlu0 %280
        %v284 = vcombine.high %v254, %v254
        %vm285 = vcmask 31744
        %v287 = vsel %vm285, %v255, 0
        %v290 = vsel %vm285, %v256, 0
        %v293 = vsel %vm285, %v257, 0
        %v296 = vsel %vm285, %v258, 0
        %vm298 = vcmask 1043456
        %v299 = vsel %vm298, %v254, 0
        %v301 = vsel %vm298, %v284, 0
        %303 = vmatprep.subr.mxu0 %v301
        %304 = vmatpush1.msra.mxu0 %v299
        %305 = vmatprep.subr.mxu0 0.0
        %306 = vmatpush1.msra.mxu0 0.0
        %307 = vmatprep.subr.mxu0 0.0
        %308 = vmatpush1.msra.mxu0 0.0
        %309 = vmatprep.subr.mxu0 0.0
        %310 = vmatpush1.msra.mxu0 0.0
        %311 = vmatprep.subr.mxu0 0.0
        %312 = vmatpush1.msra.mxu0 0.0
        %313 = vmatprep.subr.mxu0 0.0
        %314 = vmatpush1.msra.mxu0 0.0
        %315 = vmatprep.subr.mxu0 0.0
        %316 = vmatpush1.msra.mxu0 0.0
        %317 = vmatprep.subr.mxu0 0.0
        %318 = vmatpush1.msra.mxu0 0.0
        %319 = vmatprep.subr.mxu0 0.0
        %320 = vmatpush1.msra.mxu0 0.0
        %321 = vmatprep.subr.mxu0 0.0
        %322 = vmatpush1.msra.mxu0 0.0
        %323 = vmatprep.subr.mxu0 0.0
        %324 = vmatpush1.msra.mxu0 0.0
        %325 = vmatprep.subr.mxu0 0.0
        %326 = vmatpush1.msra.mxu0 0.0
        %327 = vmatprep.subr.mxu0 0.0
        %328 = vmatpush1.msra.mxu0 0.0
        %329 = vmatprep.subr.mxu0 0.0
        %330 = vmatpush1.msra.mxu0 0.0
        %331 = vmatprep.subr.mxu0 0.0
        %332 = vmatpush1.msra.mxu0 0.0
        %333 = vmatprep.subr.mxu0 0.0
        %334 = vmatpush1.msra.mxu0 0.0
        %335 = vmatprep.subr.mxu0 0.0
        %336 = vmatpush1.msra.mxu0 0.0
        %337 = vmatprep.subr.mxu0 0.0
        %338 = vmatpush1.msra.mxu0 0.0
        %339 = vmatprep.subr.mxu0 0.0
        %340 = vmatpush1.msra.mxu0 0.0
        %341 = vmatprep.subr.mxu0 0.0
        %342 = vmatpush1.msra.mxu0 0.0
        %343 = vmatprep.subr.mxu0 0.0
        %344 = vmatpush1.msra.mxu0 0.0
        %345 = vmatprep.subr.mxu0 0.0
        %346 = vmatpush1.msra.mxu0 0.0
        %347 = vmatprep.subr.mxu0 0.0
        %348 = vmatpush1.msra.mxu0 0.0
        %349 = vmatprep.subr.mxu0 0.0
        %350 = vmatpush1.msra.mxu0 0.0
        %351 = vmatprep.subr.mxu0 0.0
        %352 = vmatpush1.msra.mxu0 0.0
        %353 = vmatprep.subr.mxu0 0.0
        %354 = vmatpush1.msra.mxu0 0.0
        %355 = vmatprep.subr.mxu0 0.0
        %356 = vmatpush1.msra.mxu0 0.0
        %357 = vmatprep.subr.mxu0 0.0
        %358 = vmatpush1.msra.mxu0 0.0
        %359 = vmatprep.subr.mxu0 0.0
        %360 = vmatpush1.msra.mxu0 0.0
        %361 = vmatprep.subr.mxu0 0.0
        %362 = vmatpush1.msra.mxu0 0.0
        %363 = vmatprep.subr.mxu0 0.0
        %364 = vmatpush1.msra.mxu0 0.0
        %365 = vmatprep.subr.mxu0 0.0
        %366 = vmatpush1.msra.mxu0 0.0
        %367 = vmatprep.mubr.f32.mxu0 0.0
        %368 = vmatmul.mubr.f32.gmra.mrb[0].mxu0 %v287
        %v369 = vpop.f32.mrb[0].mxu0
        %v370 = vadd.f32 %v266, %v369
        %v371 = vpop.f32.mrb[0].mxu0
        %v372 = vadd.f32 %v266, %v371
        %373 = vmatprep.mubr.f32.mxu0 0.0
        %374 = vmatmul.mubr.f32.gmra.mrb[0].mxu0 %v290
        %v375 = vpop.f32.mrb[0].mxu0
        %v376 = vadd.f32 %v271, %v375
        %v377 = vpop.f32.mrb[0].mxu0
        %v378 = vadd.f32 %v271, %v377
        %379 = vmatprep.mubr.f32.mxu0 0.0
        %380 = vmatmul.mubr.f32.gmra.mrb[0].mxu0 %v293
        %v381 = vpop.f32.mrb[0].mxu0
        %v382 = vadd.f32 %v276, %v381
        %v383 = vpop.f32.mrb[0].mxu0
        %v384 = vadd.f32 %v276, %v383
        %385 = vmatprep.mubr.f32.mxu0 0.0
        %386 = vmatmul.mubr.f32.gmra.mrb[0].mxu0 %v296
        %v387 = vpop.f32.mrb[0].mxu0
        %v388 = vadd.f32 %v281, %v387
        %v389 = vpop.f32.mrb[0].mxu0
        %v390 = vadd.f32 %v281, %v389
        %391 = vdwg.mxu0
        %v392 = vmul.f32 %v370, 0.2
        %v393 = vmul.f32 %v372, 0.2
        %v394 = vmul.f32 %v376, 0.2
        %v395 = vmul.f32 %v378, 0.2
        %v396 = vmul.f32 %v382, 0.2
        %v397 = vmul.f32 %v384, 0.2
        %v398 = vmul.f32 %v388, 0.2
        %v399 = vmul.f32 %v390, 0.2
        %v400 = vmax.f32 %v370, %v392
        %v401 = vmax.f32 %v372, %v393
        %v402 = vmax.f32 %v376, %v394
        %v403 = vmax.f32 %v378, %v395
        %v404 = vmax.f32 %v382, %v396
        %v405 = vmax.f32 %v384, %v397
        %v406 = vmax.f32 %v388, %v398
        %v407 = vmax.f32 %v390, %v399
        %v408 = vld [vmem:[%s2] sm:$0xff]
        %v409 = vld [vmem:[%s2 + $0x8] sm:$0xff]
        %v410 = vld [vmem:[%s2 + $0x10] sm:$0xff]
        %v411 = vld [vmem:[%s2 + $0x18] sm:$0xff]
        %v412 = vld [vmem:[%s4 + $0x20] sm:$0xff]
        %v413 = vld [vmem:[%s4 + $0x28] sm:$0xff]
        %v414 = vld [vmem:[%s4 + $0x30] sm:$0xff]
        %v415 = vld [vmem:[%s4 + $0x38] sm:$0xff]
        %417 = vset.pattern.permute.xlu0 0
        %418 = vperm.xlu0 %417, %v412
        %v419 = vpop.permute.xlu0 %418
        %422 = vset.pattern.permute.xlu0 0
        %423 = vperm.xlu0 %422, %v413
        %v424 = vpop.permute.xlu0 %423
        %427 = vset.pattern.permute.xlu0 0
        %428 = vperm.xlu0 %427, %v414
        %v429 = vpop.permute.xlu0 %428
        %432 = vset.pattern.permute.xlu0 0
        %433 = vperm.xlu0 %432, %v415
        %v434 = vpop.permute.xlu0 %433
        %vm436 = vcmask 261120
        %v438 = vsel %vm436, %v408, 0
        %v441 = vsel %vm436, %v409, 0
        %v444 = vsel %vm436, %v410, 0
        %v447 = vsel %vm436, %v411, 0
        %449 = vmatprep.subr.mxu0 %v401
        %450 = vmatpush1.msra.mxu0 %v400
        %451 = vmatprep.subr.mxu0 %v403
        %452 = vmatpush1.msra.mxu0 %v402
        %453 = vmatprep.subr.mxu0 %v405
        %454 = vmatpush1.msra.mxu0 %v404
        %455 = vmatprep.subr.mxu0 %v407
        %456 = vmatpush1.msra.mxu0 %v406
        %457 = vmatprep.subr.mxu0 0.0
        %458 = vmatpush1.msra.mxu0 0.0
        %459 = vmatprep.subr.mxu0 0.0
        %460 = vmatpush1.msra.mxu0 0.0
        %461 = vmatprep.subr.mxu0 0.0
        %462 = vmatpush1.msra.mxu0 0.0
        %463 = vmatprep.subr.mxu0 0.0
        %464 = vmatpush1.msra.mxu0 0.0
        %465 = vmatprep.subr.mxu0 0.0
        %466 = vmatpush1.msra.mxu0 0.0
        %467 = vmatprep.subr.mxu0 0.0
        %468 = vmatpush1.msra.mxu0 0.0
        %469 = vmatprep.subr.mxu0 0.0
        %470 = vmatpush1.msra.mxu0 0.0
        %471 = vmatprep.subr.mxu0 0.0
        %472 = vmatpush1.msra.mxu0 0.0
        %473 = vmatprep.subr.mxu0 0.0
        %474 = vmatpush1.msra.mxu0 0.0
        %475 = vmatprep.subr.mxu0 0.0
        %476 = vmatpush1.msra.mxu0 0.0
        %477 = vmatprep.subr.mxu0 0.0
        %478 = vmatpush1.msra.mxu0 0.0
        %479 = vmatprep.subr.mxu0 0.0
        %480 = vmatpush1.msra.mxu0 0.0
        %481 = vmatprep.subr.mxu0 0.0
        %482 = vmatpush1.msra.mxu0 0.0
        %483 = vmatprep.subr.mxu0 0.0
        %484 = vmatpush1.msra.mxu0 0.0
        %485 = vmatprep.subr.mxu0 0.0
        %486 = vmatpush1.msra.mxu0 0.0
        %487 = vmatprep.subr.mxu0 0.0
        %488 = vmatpush1.msra.mxu0 0.0
        %489 = vmatprep.subr.mxu0 0.0
        %490 = vmatpush1.msra.mxu0 0.0
        %491 = vmatprep.subr.mxu0 0.0
        %492 = vmatpush1.msra.mxu0 0.0
        %493 = vmatprep.subr.mxu0 0.0
        %494 = vmatpush1.msra.mxu0 0.0
        %495 = vmatprep.subr.mxu0 0.0
        %496 = vmatpush1.msra.mxu0 0.0
        %497 = vmatprep.subr.mxu0 0.0
        %498 = vmatpush1.msra.mxu0 0.0
        %499 = vmatprep.subr.mxu0 0.0
        %500 = vmatpush1.msra.mxu0 0.0
        %501 = vmatprep.subr.mxu0 0.0
        %502 = vmatpush1.msra.mxu0 0.0
        %503 = vmatprep.subr.mxu0 0.0
        %504 = vmatpush1.msra.mxu0 0.0
        %505 = vmatprep.subr.mxu0 0.0
        %506 = vmatpush1.msra.mxu0 0.0
        %507 = vmatprep.subr.mxu0 0.0
        %508 = vmatpush1.msra.mxu0 0.0
        %509 = vmatprep.subr.mxu0 0.0
        %510 = vmatpush1.msra.mxu0 0.0
        %511 = vmatprep.subr.mxu0 0.0
        %512 = vmatpush1.msra.mxu0 0.0
        %513 = vmatprep.mubr.f32.mxu0 0.0
        %514 = vmatmul.mubr.f32.gmra.mrb[0].mxu0 %v438
        %v515 = vpop.f32.mrb[0].mxu0
        %v516 = vadd.f32 %v419, %v515
        %v517 = vpop.f32.mrb[0].mxu0
        %v518 = vadd.f32 %v419, %v517
        %519 = vmatprep.mubr.f32.mxu0 0.0
        %520 = vmatmul.mubr.f32.gmra.mrb[0].mxu0 %v441
        %v521 = vpop.f32.mrb[0].mxu0
        %v522 = vadd.f32 %v424, %v521
        %v523 = vpop.f32.mrb[0].mxu0
        %v524 = vadd.f32 %v424, %v523
        %525 = vmatprep.mubr.f32.mxu0 0.0
        %526 = vmatmul.mubr.f32.gmra.mrb[0].mxu0 %v444
        %v527 = vpop.f32.mrb[0].mxu0
        %v528 = vadd.f32 %v429, %v527
        %v529 = vpop.f32.mrb[0].mxu0
        %v530 = vadd.f32 %v429, %v529
        %531 = vmatprep.mubr.f32.mxu0 0.0
        %532 = vmatmul.mubr.f32.gmra.mrb[0].mxu0 %v447
        %v533 = vpop.f32.mrb[0].mxu0
        %v534 = vadd.f32 %v434, %v533
        %v535 = vpop.f32.mrb[0].mxu0
        %v536 = vadd.f32 %v434, %v535
        %537 = vdwg.mxu0
        %v538 = vmul.f32 %v516, 0.2
        %v539 = vmul.f32 %v518, 0.2
        %v540 = vmul.f32 %v522, 0.2
        %v541 = vmul.f32 %v524, 0.2
        %v542 = vmul.f32 %v528, 0.2
        %v543 = vmul.f32 %v530, 0.2
        %v544 = vmul.f32 %v534, 0.2
        %v545 = vmul.f32 %v536, 0.2
        %v546 = vmax.f32 %v516, %v538
        %v547 = vmax.f32 %v518, %v539
        %v548 = vmax.f32 %v522, %v540
        %v549 = vmax.f32 %v524, %v541
        %v550 = vmax.f32 %v528, %v542
        %v551 = vmax.f32 %v530, %v543
        %v552 = vmax.f32 %v534, %v544
        %v553 = vmax.f32 %v536, %v545
        %v554 = vld [vmem:[%s3] sm:$0xff]
        %v555 = vld [vmem:[%s4 + $0x40] sm:$0xff]
        %557 = vset.pattern.permute.xlu0 0
        %558 = vperm.xlu0 %557, %v555
        %v559 = vpop.permute.xlu0 %558
        %v562 = vsel %vm436, %v554, 0
        %564 = vmatprep.subr.mxu0 %v547
        %565 = vmatpush1.msra.mxu0 %v546
        %566 = vmatprep.subr.mxu0 %v549
        %567 = vmatpush1.msra.mxu0 %v548
        %568 = vmatprep.subr.mxu0 %v551
        %569 = vmatpush1.msra.mxu0 %v550
        %570 = vmatprep.subr.mxu0 %v553
        %571 = vmatpush1.msra.mxu0 %v552
        %572 = vmatprep.subr.mxu0 0.0
        %573 = vmatpush1.msra.mxu0 0.0
        %574 = vmatprep.subr.mxu0 0.0
        %575 = vmatpush1.msra.mxu0 0.0
        %576 = vmatprep.subr.mxu0 0.0
        %577 = vmatpush1.msra.mxu0 0.0
        %578 = vmatprep.subr.mxu0 0.0
        %579 = vmatpush1.msra.mxu0 0.0
        %580 = vmatprep.subr.mxu0 0.0
        %581 = vmatpush1.msra.mxu0 0.0
        %582 = vmatprep.subr.mxu0 0.0
        %583 = vmatpush1.msra.mxu0 0.0
        %584 = vmatprep.subr.mxu0 0.0
        %585 = vmatpush1.msra.mxu0 0.0
        %586 = vmatprep.subr.mxu0 0.0
        %587 = vmatpush1.msra.mxu0 0.0
        %588 = vmatprep.subr.mxu0 0.0
        %589 = vmatpush1.msra.mxu0 0.0
        %590 = vmatprep.subr.mxu0 0.0
        %591 = vmatpush1.msra.mxu0 0.0
        %592 = vmatprep.subr.mxu0 0.0
        %593 = vmatpush1.msra.mxu0 0.0
        %594 = vmatprep.subr.mxu0 0.0
        %595 = vmatpush1.msra.mxu0 0.0
        %596 = vmatprep.subr.mxu0 0.0
        %597 = vmatpush1.msra.mxu0 0.0
        %598 = vmatprep.subr.mxu0 0.0
        %599 = vmatpush1.msra.mxu0 0.0
        %600 = vmatprep.subr.mxu0 0.0
        %601 = vmatpush1.msra.mxu0 0.0
        %602 = vmatprep.subr.mxu0 0.0
        %603 = vmatpush1.msra.mxu0 0.0
        %604 = vmatprep.subr.mxu0 0.0
        %605 = vmatpush1.msra.mxu0 0.0
        %606 = vmatprep.subr.mxu0 0.0
        %607 = vmatpush1.msra.mxu0 0.0
        %608 = vmatprep.subr.mxu0 0.0
        %609 = vmatpush1.msra.mxu0 0.0
        %610 = vmatprep.subr.mxu0 0.0
        %611 = vmatpush1.msra.mxu0 0.0
        %612 = vmatprep.subr.mxu0 0.0
        %613 = vmatpush1.msra.mxu0 0.0
        %614 = vmatprep.subr.mxu0 0.0
        %615 = vmatpush1.msra.mxu0 0.0
        %616 = vmatprep.subr.mxu0 0.0
        %617 = vmatpush1.msra.mxu0 0.0
        %618 = vmatprep.subr.mxu0 0.0
        %619 = vmatpush1.msra.mxu0 0.0
        %620 = vmatprep.subr.mxu0 0.0
        %621 = vmatpush1.msra.mxu0 0.0
        %622 = vmatprep.subr.mxu0 0.0
        %623 = vmatpush1.msra.mxu0 0.0
        %624 = vmatprep.subr.mxu0 0.0
        %625 = vmatpush1.msra.mxu0 0.0
        %626 = vmatprep.subr.mxu0 0.0
        %627 = vmatpush1.msra.mxu0 0.0
        %628 = vmatprep.mubr.f32.mxu0 0.0
        %629 = vmatmul.mubr.f32.gmra.mrb[0].mxu0 %v562
        %v630 = vpop.f32.mrb[0].mxu0
        %v631 = vadd.f32 %v559, %v630
        %v632 = vpop.f32.mrb[0].mxu0
        %v633 = vadd.f32 %v559, %v632
        %634 = vdwg.mxu0
        %v635 = vmul.f32 %v631, 0.2
        %v636 = vmul.f32 %v633, 0.2
        %v637 = vmax.f32 %v631, %v635
        %v638 = vmax.f32 %v633, %v636
        %639 = vst [vmem:[%s242] sm:$0xff] %v637
        %640 = vst [vmem:[%s242 + $0x8] sm:$0xff] %v638
        %s641 = sand.u32 %s153, 1
        %s642 = scalar_lea.sflag [#allocation3], %s641
        %s643 = sand.u32 %s153, 1
        %s644 = smul.addr %s643, 16
        %s645 = scalar_lea.vmem [#allocation2], %s644
        // Predicated region
        $region41: #{tpu_custom_call.1} parent=39 // pred_check
          %p646 = pneg %p163
        $region42: #{tpu_custom_call.1} parent=39 // pred_check_branch
          %648 = sbr.rel (%p646) target = $region44
        $region43: #{tpu_custom_call.1} parent=39 // pred_region
          %s649 = smul.u32 2, %s24
          %s651 = ssub.s32 256, 256
          %652 = vsyncadd %s642, %s651
          %s653 = smul.addr %s23, 2
          %s654 = sadd.s32 %s649, %s653
          %s655 = smul.addr %s654, 128
          %s656 = scalar_lea.hbm %s5, %s655
          %s658 = sshll.u32 %s645, 4
          %s659 = int_to_ptr.vmem [resolvable:$true] %s658
          %661 = dma.vmem_to_hbm [thread:$0]  %s659, 256, %s656, %s642
        $region44: #{tpu_custom_call.1} parent=39 // pred_fallthru
          _
      $region40: #{tpu_custom_call.1} parent=5 // pred_fallthru
        _
      %p662 = scmp.le.s32.totalorder 2, %s14
      // Predicated region
      $region45: #{tpu_custom_call.1} parent=5 // pred_check
        %p663 = pneg %p662
      $region46: #{tpu_custom_call.1} parent=5 // pred_check_branch
        %665 = sbr.rel (%p663) target = $region48
      $region47: #{tpu_custom_call.1} parent=5 // pred_region
        %s666 = ssub.s32 %s14, 2
        // Predicated region
        $region49: #{tpu_custom_call.1} parent=47 // pred_check
          %p667 = pneg %p169
        $region50: #{tpu_custom_call.1} parent=47 // pred_check_branch
          %669 = sbr.rel (%p667) target = $region52
        $region51: #{tpu_custom_call.1} parent=47 // pred_region
          %s670 = sand.u32 %s154, 1
          %s671 = scalar_lea.sflag [#allocation3], %s670
          %s672 = sand.u32 %s154, 1
          %s673 = smul.addr %s672, 16
          %s674 = scalar_lea.vmem [#allocation2], %s673
          %675 = dma.done %s671, 256
        $region52: #{tpu_custom_call.1} parent=47 // pred_fallthru
          _
      $region48: #{tpu_custom_call.1} parent=5 // pred_fallthru
        _
    $region6: #{tpu_custom_call.1} parent=1 // loop_footer
      %s18 = sadd.s32 1, %s14
    $region7: #{tpu_custom_call.1} parent=1 // loop_footer_branch
      %13 = sbr.rel target = $region3
    $region8: #{tpu_custom_call.1} parent=1 // loop_exit
      _
    %676 = vsyncpa [#allocation3], 1
    %s677 = scalar_lea.sflag [#allocation3], 1
    %678 = vsyncpa %s677, 1

</llo_original>
